<compile_context>
chip_gen: v7x
topology: tpu7x:2x2x1
jax: 0.10.0
libtpu: 0.0.40
codegen_flags: <defaults>
</compile_context>

<pallas_src>
import functools

import jax
import jax.numpy as jnp
import numpy as np
from jax import lax
from jax.experimental import pallas as pl
from jax.experimental.pallas import tpu as pltpu


def _round_up(n, m):
    return ((n + m - 1) // m) * m


def _hw_budgets():
    """Generation-aware VMEM budgets (v7x: 64 MiB physical, v5e/v6e: 128 MiB)."""
    cap = 64 * 1024 * 1024                       # conservative default (v7x-sized)
    try:
        cap = int(pltpu.get_tpu_info().vmem_capacity_bytes)
    except Exception:
        pass
    vmem_limit = min(int(cap * 0.6), 100 * 1024 * 1024)
    slab_budget = int(cap * 0.3)                 # bytes for ~3 live f32 weight slabs
    return vmem_limit, slab_budget


def _pick_tile(P, dim, dpad, slab_budget):
    """Lane-dense pixel tile: large enough to amortize per-grid-step overhead, small
    enough that ~3 live f32 copies of the (dim*dpad, TP) weight slab fit in VMEM."""
    tp_max = slab_budget // (dim * dpad * 4 * 3)
    tp_max = max(256, min(8192, (tp_max // 128) * 128))
    P128 = _round_up(P, 128)
    if P128 <= tp_max:
        return P128
    # Prefer a tile that divides the 128-padded pixel count: avoids whole-image
    # pad / un-pad copies in HBM (the un-pad is L x image size in the broadcast branch).
    n = P128 // 128
    for k in range(tp_max // 128, 0, -1):
        if n % k == 0 and 4 * k * 128 >= tp_max:
            return k * 128
    return tp_max


def _compiler_params(dim_sem, vmem_limit):
    return pltpu.CompilerParams(dimension_semantics=dim_sem,
                                vmem_limit_bytes=int(vmem_limit))


def _flatten_pad(x, tp):
    B, C, H, W = x.shape
    P = H * W
    x_flat = x.reshape(B, C, P)
    P_pad = _round_up(P, tp)
    if P_pad != P:
        x_flat = jnp.pad(x_flat, ((0, 0), (0, 0), (0, P_pad - P)))
    return x_flat, P, P_pad


def _prep_lut(lut, dpad, mm_dtype):
    """(L, 3, d, d, d) -> (L, 3*dpad, d*dpad): rows=(c, b), cols=(g, r).

    The b and r axes are zero-padded to dpad (multiple of 8) so that all in-kernel
    slices / concatenations are sublane-tile aligned; the padding contributes 0."""
    L = lut.shape[0]
    d = lut.shape[-1]
    pad = dpad - d
    if pad:
        lut = jnp.pad(lut, ((0, 0), (0, 0), (0, pad), (0, 0), (0, pad)))
    return lut.reshape(L, 3 * dpad, d * dpad).astype(mm_dtype)


# --------------------------- kernel bodies ----------------------------------------
def _build_weights(x_ref, *, dim, dpad, mm_dtype):
    """Per-pixel separable interpolation weights for one (3, TP) pixel tile.

    Returns:
      w_gr: (dim*dpad, TP) mm_dtype  -- (g, r) corner weights (4 nonzeros per pixel)
      w_b : (dpad, TP)     float32   -- b corner weights (2 nonzeros per pixel)
    """
    inv_binsize = np.float32((dim - 1) / 1.000001)

    x = x_ref[...].astype(jnp.float32)                       # (3, TP)
    xs = x * inv_binsize
    xf = jnp.floor(xs)
    xd = xs - xf                                             # == fmod(x, binsize)/binsize, x >= 0
    xi = jnp.clip(xf.astype(jnp.int32), 0, dim - 2)          # clamped cell index

    r_id, g_id, b_id = xi[0:1, :], xi[1:2, :], xi[2:3, :]    # (1, TP) each
    r_d, g_d, b_d = xd[0:1, :], xd[1:2, :], xd[2:3, :]

    iota = lax.broadcasted_iota(jnp.int32, (dpad, 1), 0)     # (dpad, 1)
    w_r = jnp.where(iota == r_id, 1.0 - r_d,
          jnp.where(iota == r_id + 1, r_d, 0.0))             # (dpad, TP)
    w_b = jnp.where(iota == b_id, 1.0 - b_d,
          jnp.where(iota == b_id + 1, b_d, 0.0))             # (dpad, TP)

    # Outer product w_gr[g*dpad + r, p] = w_g[g, p] * w_r[r, p], built per-g from
    # cheap (1, TP) rows: ~1 VPU multiply per element of the big slab instead of a
    # 4-deep compare/select chain.  dpad % 8 == 0 keeps the concat tile-aligned.
    pieces = []
    for g in range(dim):
        wg_row = jnp.where(g_id == g, 1.0 - g_d,
                 jnp.where(g_id == g - 1, g_d, 0.0))         # (1, TP)
        pieces.append(w_r * wg_row)                          # (dpad, TP)
    w_gr = jnp.concatenate(pieces, axis=0).astype(mm_dtype)  # (dim*dpad, TP)
    return w_gr, w_b


def _apply_lut(lut_ref, w_gr, w_b, o_ref, *, dpad):
    """lut_ref: (3*dpad, dim*dpad) mm_dtype; w_gr: (dim*dpad, TP); w_b: (dpad, TP)."""
    lut = lut_ref[...]
    t = jnp.dot(lut, w_gr, preferred_element_type=jnp.float32)   # (3*dpad, TP)  MXU
    outs = []
    for c in range(3):
        tc = t[c * dpad:(c + 1) * dpad, :] * w_b                 # (dpad, TP)   VPU
        outs.append(jnp.sum(tc, axis=0, keepdims=True))          # (1, TP)      XLU
    o_ref[...] = jnp.concatenate(outs, axis=0).astype(o_ref.dtype)


def _pairs_kernel(lut_ref, x_ref, o_ref, *, dim, dpad, mm_dtype):
    """One (lut, pixel-tile) pair."""
    w_gr, w_b = _build_weights(x_ref, dim=dim, dpad=dpad, mm_dtype=mm_dtype)
    _apply_lut(lut_ref, w_gr, w_b, o_ref, dpad=dpad)


def _bcast_kernel(lut_ref, x_ref, o_ref, wgr_sc, wb_sc, *, dim, dpad, mm_dtype):
    """grid = (B, tiles, L); L innermost.  Weights are built once per (b, tile) and
    reused from VMEM scratch for every LUT."""
    @pl.when(pl.program_id(2) == 0)
    def _():
        w_gr, w_b = _build_weights(x_ref, dim=dim, dpad=dpad, mm_dtype=mm_dtype)
        wgr_sc[...] = w_gr
        wb_sc[...] = w_b

    _apply_lut(lut_ref, wgr_sc[...], wb_sc[...], o_ref, dpad=dpad)


# --------------------------- wrappers ----------------------------------------------
def _trilerp_per_image(lut, x, *, mm_dtype, shared_lut):
    """lut: (B or 1, 3, d, d, d), x: (B, 3, H, W) -> (B, 3, H, W)."""
    B, C, H, W = x.shape
    assert C == 3, "trilinear LUT expects 3 channels (RGB)"
    dim = lut.shape[-1]
    dpad = _round_up(max(dim, 2), 8)
    vmem_limit, slab_budget = _hw_budgets()
    tp = _pick_tile(H * W, dim, dpad, slab_budget)

    lut2 = _prep_lut(lut, dpad, mm_dtype)
    x_flat, P, P_pad = _flatten_pad(x, tp)
    grid = (B, P_pad // tp)
    lut_map = (lambda bi, pi: (0, 0, 0)) if shared_lut else (lambda bi, pi: (bi, 0, 0))

    out = pl.pallas_call(
        functools.partial(_pairs_kernel, dim=dim, dpad=dpad, mm_dtype=mm_dtype),
        out_shape=jax.ShapeDtypeStruct((B, 3, P_pad), x.dtype),
        grid_spec=pltpu.PrefetchScalarGridSpec(
            num_scalar_prefetch=0,
            grid=grid,
            in_specs=[
                pl.BlockSpec((None, 3 * dpad, dim * dpad), lut_map),
                pl.BlockSpec((None, 3, tp), lambda bi, pi: (bi, 0, pi)),
            ],
            out_specs=pl.BlockSpec((None, 3, tp), lambda bi, pi: (bi, 0, pi)),
        ),
        compiler_params=_compiler_params(("parallel", "parallel"), vmem_limit),
    )(lut2, x_flat)

    if P_pad != P:
        out = out[:, :, :P]
    return out.reshape(B, 3, H, W)


def _trilerp_broadcast(lut, x, *, mm_dtype):
    """Apply every lut[l] to every x[n].  lut: (L, 3, d, d, d), x: (N, 3, H, W)
    -> (N, L, 3, H, W)."""
    L = lut.shape[0]
    B, C, H, W = x.shape
    assert C == 3, "trilinear LUT expects 3 channels (RGB)"
    dim = lut.shape[-1]
    dpad = _round_up(max(dim, 2), 8)
    vmem_limit, slab_budget = _hw_budgets()
    tp = _pick_tile(H * W, dim, dpad, slab_budget)

    lut2 = _prep_lut(lut, dpad, mm_dtype)
    x_flat, P, P_pad = _flatten_pad(x, tp)
    grid = (B, P_pad // tp, L)            # L innermost: per-pixel weights reused over L

    out = pl.pallas_call(
        functools.partial(_bcast_kernel, dim=dim, dpad=dpad, mm_dtype=mm_dtype),
        out_shape=jax.ShapeDtypeStruct((B, L, 3, P_pad), x.dtype),
        grid_spec=pltpu.PrefetchScalarGridSpec(
            num_scalar_prefetch=0,
            grid=grid,
            in_specs=[
                pl.BlockSpec((None, 3 * dpad, dim * dpad), lambda bi, pi, li: (li, 0, 0)),
                pl.BlockSpec((None, 3, tp), lambda bi, pi, li: (bi, 0, pi)),
            ],
            out_specs=pl.BlockSpec((None, None, 3, tp),
                                   lambda bi, pi, li: (bi, li, 0, pi)),
            scratch_shapes=[
                pltpu.VMEM((dim * dpad, tp), mm_dtype),   # w_gr carried across L
                pltpu.VMEM((dpad, tp), jnp.float32),      # w_b  carried across L
            ],
        ),
        compiler_params=_compiler_params(("parallel", "parallel", "arbitrary"),
                                         vmem_limit),
    )(lut2, x_flat)

    if P_pad != P:
        out = out[:, :, :, :P]
    return out.reshape(B, L, 3, H, W)


def trilinear_interpolation(lut, x, *, mm_dtype=jnp.float32):
    """Mirror of TrilinearInterpolation.forward branching.

    lut: (NL, 3, dim, dim, dim)   x: (N, 3, H, W)
      NL == 1            -> (N, 3, H, W)
      NL == N  (NL > 1)  -> per-sample LUT, (N, 3, H, W)
      otherwise          -> (N, NL, 3, H, W)
    mm_dtype: jnp.float32 (exact) or jnp.bfloat16 (fast MXU path, ~1e-3 rel error).
    """
    NL = lut.shape[0]
    N = x.shape[0]
    if NL > 1:
        if NL == N:
            return _trilerp_per_image(lut, x, mm_dtype=mm_dtype, shared_lut=False)
        return _trilerp_broadcast(lut, x, mm_dtype=mm_dtype)       # (N, NL, 3, H, W)
    return _trilerp_per_image(lut, x, mm_dtype=mm_dtype, shared_lut=True)


# ---------------- pure-JAX reference (same math, gather-based) ----------------
def _ref_trilerp_single(lut, x):
    """lut: (3, d, d, d), x: (3, H, W)."""
    dim = lut.shape[-1]
    binsize = 1.000001 / (dim - 1)
    lut_flat = lut.reshape(3, -1)
    r, g, b = x[0], x[1], x[2]
    r_id = jnp.floor(r / binsize).astype(jnp.int32)
    g_id = jnp.floor(g / binsize).astype(jnp.int32)
    b_id = jnp.floor(b / binsize).astype(jnp.int32)
    r_d = r / binsize - r_id
    g_d = g / binsize - g_id
    b_d = b / binsize - b_id
    out = jnp.zeros_like(x)
    for dr in (0, 1):
        for dg in (0, 1):
            for db in (0, 1):
                idx = (r_id + dr) + (g_id + dg) * dim + (b_id + db) * dim * dim
                w = ((r_d if dr else 1.0 - r_d)
                     * (g_d if dg else 1.0 - g_d)
                     * (b_d if db else 1.0 - b_d))
                out = out + w[None] * lut_flat[:, idx]
    return out


if __name__ == "__main__":
    key = jax.random.PRNGKey(0)
    k1, k2, k3 = jax.random.split(key, 3)

    # small, module-consistent shapes
    N, C, H, W = 2, 3, 16, 16
    dim = 9
    x = jax.random.uniform(k1, (N, C, H, W), jnp.float32)                     # in [0, 1)
    lut_per = jax.random.uniform(k2, (N, 3, dim, dim, dim), jnp.float32) * 2.0 - 1.0
    lut_multi = jax.random.uniform(k3, (3, 3, dim, dim, dim), jnp.float32) * 2.0 - 1.0

    # Branch 1: per-sample LUT (NL == N), exact f32 MXU path
    out_pairs = jax.block_until_ready(trilinear_interpolation(lut_per, x))
    assert out_pairs.shape == (N, C, H, W)
    ref_pairs = jnp.stack([_ref_trilerp_single(lut_per[i], x[i]) for i in range(N)])
    np.testing.assert_allclose(np.asarray(out_pairs), np.asarray(ref_pairs),
                               atol=1e-5, rtol=1e-5)

    # Branch 2: single shared LUT (NL == 1)
    out_single = jax.block_until_ready(trilinear_interpolation(lut_per[:1], x))
    assert out_single.shape == (N, C, H, W)
    ref_single = jnp.stack([_ref_trilerp_single(lut_per[0], x[i]) for i in range(N)])
    np.testing.assert_allclose(np.asarray(out_single), np.asarray(ref_single),
                               atol=1e-5, rtol=1e-5)

    # Branch 3: NL > 1 and NL != N  -> (N, NL, 3, H, W)
    out_multi = jax.block_until_ready(trilinear_interpolation(lut_multi, x))
    assert out_multi.shape == (N, 3, C, H, W)
    ref_multi = jnp.stack([jnp.stack([_ref_trilerp_single(lut_multi[l], x[i])
                                      for l in range(3)]) for i in range(N)])
    np.testing.assert_allclose(np.asarray(out_multi), np.asarray(ref_multi),
                               atol=1e-5, rtol=1e-5)

    # Fast bf16-MXU path (opt-in): same semantics, looser tolerance.
    out_bf16 = jax.block_until_ready(
        trilinear_interpolation(lut_multi, x, mm_dtype=jnp.bfloat16))
    np.testing.assert_allclose(np.asarray(out_bf16), np.asarray(ref_multi),
                               atol=3e-2, rtol=0)

    # TODO(synk): only the forward pass is implemented (no custom VJP mirroring
    # trilinear.backward for the LUT / image gradients).
    print("KERNEL_OK")
</pallas_src>

<mosaic_0001>
module attributes {stable_mosaic.version = 11 : i64} {
  func.func @_pairs_kernel(%arg0: i32, %arg1: i32, %arg2: memref<1x48x144xf32, #tpu.memory_space<vmem>>, %arg3: memref<1x3x256xf32, #tpu.memory_space<vmem>>, %arg4: memref<1x3x256xf32, #tpu.memory_space<vmem>>) attributes {dimension_semantics = [#tpu.dimension_semantics<parallel>, #tpu.dimension_semantics<parallel>], iteration_bounds = array<i64: 2, 1>, scalar_prefetch = 0 : i64, scratch_operands = 0 : i64, tpu.core_type = #tpu.core_type<tc>, window_params = [{transform_indices = @transform_0, window_bounds = array<i64: 1, 48, 144>}, {transform_indices = @transform_1, window_bounds = array<i64: 1, 3, 256>}, {transform_indices = @transform_2, window_bounds = array<i64: 1, 3, 256>}]} {
    %c0 = arith.constant 0 : index
    %c0_0 = arith.constant 0 : index
    %c0_1 = arith.constant 0 : index
    %0 = vector.load %arg3[%c0, %c0_0, %c0_1] : memref<1x3x256xf32, #tpu.memory_space<vmem>>, vector<1x3x256xf32>
    %1 = vector.shape_cast %0 : vector<1x3x256xf32> to vector<3x256xf32>
    %cst = arith.constant 7.99999189 : f32
    %2 = vector.broadcast %cst : f32 to vector<3x256xf32>
    %3 = arith.mulf %1, %2 : vector<3x256xf32>
    %4 = math.floor %3 : vector<3x256xf32>
    %5 = arith.subf %3, %4 : vector<3x256xf32>
    %6 = arith.fptosi %4 : vector<3x256xf32> to vector<3x256xi32>
    %c0_i32 = arith.constant 0 : i32
    %c7_i32 = arith.constant 7 : i32
    %7 = vector.broadcast %c0_i32 : i32 to vector<3x256xi32>
    %8 = arith.maxsi %7, %6 : vector<3x256xi32>
    %9 = vector.broadcast %c7_i32 : i32 to vector<3x256xi32>
    %10 = arith.minsi %9, %8 : vector<3x256xi32>
    %11 = vector.extract_strided_slice %10 {offsets = [0, 0], sizes = [1, 256], strides = [1, 1]} : vector<3x256xi32> to vector<1x256xi32>
    %12 = vector.extract_strided_slice %10 {offsets = [1, 0], sizes = [1, 256], strides = [1, 1]} : vector<3x256xi32> to vector<1x256xi32>
    %13 = vector.extract_strided_slice %10 {offsets = [2, 0], sizes = [1, 256], strides = [1, 1]} : vector<3x256xi32> to vector<1x256xi32>
    %14 = vector.extract_strided_slice %5 {offsets = [0, 0], sizes = [1, 256], strides = [1, 1]} : vector<3x256xf32> to vector<1x256xf32>
    %15 = vector.extract_strided_slice %5 {offsets = [1, 0], sizes = [1, 256], strides = [1, 1]} : vector<3x256xf32> to vector<1x256xf32>
    %16 = vector.extract_strided_slice %5 {offsets = [2, 0], sizes = [1, 256], strides = [1, 1]} : vector<3x256xf32> to vector<1x256xf32>
    %17 = tpu.iota {dimensions = array<i32: 0>} : vector<16x1xi32>
    %18 = vector.broadcast %17 : vector<16x1xi32> to vector<16x256xi32>
    %19 = vector.broadcast %11 : vector<1x256xi32> to vector<16x256xi32>
    %20 = arith.cmpi eq, %18, %19 : vector<16x256xi32>
    %cst_2 = arith.constant 1.000000e+00 : f32
    %21 = vector.broadcast %cst_2 : f32 to vector<1x256xf32>
    %22 = arith.subf %21, %14 : vector<1x256xf32>
    %c1_i32 = arith.constant 1 : i32
    %23 = vector.broadcast %c1_i32 : i32 to vector<1x256xi32>
    %24 = arith.addi %11, %23 : vector<1x256xi32>
    %25 = vector.broadcast %17 : vector<16x1xi32> to vector<16x256xi32>
    %26 = vector.broadcast %24 : vector<1x256xi32> to vector<16x256xi32>
    %27 = arith.cmpi eq, %25, %26 : vector<16x256xi32>
    %cst_3 = arith.constant 0.000000e+00 : f32
    %28 = vector.shape_cast %14 : vector<1x256xf32> to vector<1x256xf32>
    %29 = vector.broadcast %28 : vector<1x256xf32> to vector<16x256xf32>
    %30 = vector.broadcast %cst_3 : f32 to vector<16x256xf32>
    %31 = arith.select %27, %29, %30 : vector<16x256xi1>, vector<16x256xf32>
    %32 = vector.shape_cast %22 : vector<1x256xf32> to vector<1x256xf32>
    %33 = vector.broadcast %32 : vector<1x256xf32> to vector<16x256xf32>
    %34 = arith.select %20, %33, %31 : vector<16x256xi1>, vector<16x256xf32>
    %35 = vector.broadcast %17 : vector<16x1xi32> to vector<16x256xi32>
    %36 = vector.broadcast %13 : vector<1x256xi32> to vector<16x256xi32>
    %37 = arith.cmpi eq, %35, %36 : vector<16x256xi32>
    %cst_4 = arith.constant 1.000000e+00 : f32
    %38 = vector.broadcast %cst_4 : f32 to vector<1x256xf32>
    %39 = arith.subf %38, %16 : vector<1x256xf32>
    %c1_i32_5 = arith.constant 1 : i32
    %40 = vector.broadcast %c1_i32_5 : i32 to vector<1x256xi32>
    %41 = arith.addi %13, %40 : vector<1x256xi32>
    %42 = vector.broadcast %17 : vector<16x1xi32> to vector<16x256xi32>
    %43 = vector.broadcast %41 : vector<1x256xi32> to vector<16x256xi32>
    %44 = arith.cmpi eq, %42, %43 : vector<16x256xi32>
    %cst_6 = arith.constant 0.000000e+00 : f32
    %45 = vector.shape_cast %16 : vector<1x256xf32> to vector<1x256xf32>
    %46 = vector.broadcast %45 : vector<1x256xf32> to vector<16x256xf32>
    %47 = vector.broadcast %cst_6 : f32 to vector<16x256xf32>
    %48 = arith.select %44, %46, %47 : vector<16x256xi1>, vector<16x256xf32>
    %49 = vector.shape_cast %39 : vector<1x256xf32> to vector<1x256xf32>
    %50 = vector.broadcast %49 : vector<1x256xf32> to vector<16x256xf32>
    %51 = arith.select %37, %50, %48 : vector<16x256xi1>, vector<16x256xf32>
    %c0_i32_7 = arith.constant 0 : i32
    %52 = vector.broadcast %c0_i32_7 : i32 to vector<1x256xi32>
    %53 = arith.cmpi eq, %12, %52 : vector<1x256xi32>
    %cst_8 = arith.constant 1.000000e+00 : f32
    %54 = vector.broadcast %cst_8 : f32 to vector<1x256xf32>
    %55 = arith.subf %54, %15 : vector<1x256xf32>
    %c-1_i32 = arith.constant -1 : i32
    %56 = vector.broadcast %c-1_i32 : i32 to vector<1x256xi32>
    %57 = arith.cmpi eq, %12, %56 : vector<1x256xi32>
    %cst_9 = arith.constant 0.000000e+00 : f32
    %58 = vector.broadcast %cst_9 : f32 to vector<1x256xf32>
    %59 = arith.select %57, %15, %58 : vector<1x256xi1>, vector<1x256xf32>
    %60 = arith.select %53, %55, %59 : vector<1x256xi1>, vector<1x256xf32>
    %61 = vector.broadcast %60 : vector<1x256xf32> to vector<16x256xf32>
    %62 = arith.mulf %34, %61 : vector<16x256xf32>
    %c1_i32_10 = arith.constant 1 : i32
    %63 = vector.broadcast %c1_i32_10 : i32 to vector<1x256xi32>
    %64 = arith.cmpi eq, %12, %63 : vector<1x256xi32>
    %cst_11 = arith.constant 1.000000e+00 : f32
    %65 = vector.broadcast %cst_11 : f32 to vector<1x256xf32>
    %66 = arith.subf %65, %15 : vector<1x256xf32>
    %c0_i32_12 = arith.constant 0 : i32
    %67 = vector.broadcast %c0_i32_12 : i32 to vector<1x256xi32>
    %68 = arith.cmpi eq, %12, %67 : vector<1x256xi32>
    %cst_13 = arith.constant 0.000000e+00 : f32
    %69 = vector.broadcast %cst_13 : f32 to vector<1x256xf32>
    %70 = arith.select %68, %15, %69 : vector<1x256xi1>, vector<1x256xf32>
    %71 = arith.select %64, %66, %70 : vector<1x256xi1>, vector<1x256xf32>
    %72 = vector.broadcast %71 : vector<1x256xf32> to vector<16x256xf32>
    %73 = arith.mulf %34, %72 : vector<16x256xf32>
    %c2_i32 = arith.constant 2 : i32
    %74 = vector.broadcast %c2_i32 : i32 to vector<1x256xi32>
    %75 = arith.cmpi eq, %12, %74 : vector<1x256xi32>
    %cst_14 = arith.constant 1.000000e+00 : f32
    %76 = vector.broadcast %cst_14 : f32 to vector<1x256xf32>
    %77 = arith.subf %76, %15 : vector<1x256xf32>
    %c1_i32_15 = arith.constant 1 : i32
    %78 = vector.broadcast %c1_i32_15 : i32 to vector<1x256xi32>
    %79 = arith.cmpi eq, %12, %78 : vector<1x256xi32>
    %cst_16 = arith.constant 0.000000e+00 : f32
    %80 = vector.broadcast %cst_16 : f32 to vector<1x256xf32>
    %81 = arith.select %79, %15, %80 : vector<1x256xi1>, vector<1x256xf32>
    %82 = arith.select %75, %77, %81 : vector<1x256xi1>, vector<1x256xf32>
    %83 = vector.broadcast %82 : vector<1x256xf32> to vector<16x256xf32>
    %84 = arith.mulf %34, %83 : vector<16x256xf32>
    %c3_i32 = arith.constant 3 : i32
    %85 = vector.broadcast %c3_i32 : i32 to vector<1x256xi32>
    %86 = arith.cmpi eq, %12, %85 : vector<1x256xi32>
    %cst_17 = arith.constant 1.000000e+00 : f32
    %87 = vector.broadcast %cst_17 : f32 to vector<1x256xf32>
    %88 = arith.subf %87, %15 : vector<1x256xf32>
    %c2_i32_18 = arith.constant 2 : i32
    %89 = vector.broadcast %c2_i32_18 : i32 to vector<1x256xi32>
    %90 = arith.cmpi eq, %12, %89 : vector<1x256xi32>
    %cst_19 = arith.constant 0.000000e+00 : f32
    %91 = vector.broadcast %cst_19 : f32 to vector<1x256xf32>
    %92 = arith.select %90, %15, %91 : vector<1x256xi1>, vector<1x256xf32>
    %93 = arith.select %86, %88, %92 : vector<1x256xi1>, vector<1x256xf32>
    %94 = vector.broadcast %93 : vector<1x256xf32> to vector<16x256xf32>
    %95 = arith.mulf %34, %94 : vector<16x256xf32>
    %c4_i32 = arith.constant 4 : i32
    %96 = vector.broadcast %c4_i32 : i32 to vector<1x256xi32>
    %97 = arith.cmpi eq, %12, %96 : vector<1x256xi32>
    %cst_20 = arith.constant 1.000000e+00 : f32
    %98 = vector.broadcast %cst_20 : f32 to vector<1x256xf32>
    %99 = arith.subf %98, %15 : vector<1x256xf32>
    %c3_i32_21 = arith.constant 3 : i32
    %100 = vector.broadcast %c3_i32_21 : i32 to vector<1x256xi32>
    %101 = arith.cmpi eq, %12, %100 : vector<1x256xi32>
    %cst_22 = arith.constant 0.000000e+00 : f32
    %102 = vector.broadcast %cst_22 : f32 to vector<1x256xf32>
    %103 = arith.select %101, %15, %102 : vector<1x256xi1>, vector<1x256xf32>
    %104 = arith.select %97, %99, %103 : vector<1x256xi1>, vector<1x256xf32>
    %105 = vector.broadcast %104 : vector<1x256xf32> to vector<16x256xf32>
    %106 = arith.mulf %34, %105 : vector<16x256xf32>
    %c5_i32 = arith.constant 5 : i32
    %107 = vector.broadcast %c5_i32 : i32 to vector<1x256xi32>
    %108 = arith.cmpi eq, %12, %107 : vector<1x256xi32>
    %cst_23 = arith.constant 1.000000e+00 : f32
    %109 = vector.broadcast %cst_23 : f32 to vector<1x256xf32>
    %110 = arith.subf %109, %15 : vector<1x256xf32>
    %c4_i32_24 = arith.constant 4 : i32
    %111 = vector.broadcast %c4_i32_24 : i32 to vector<1x256xi32>
    %112 = arith.cmpi eq, %12, %111 : vector<1x256xi32>
    %cst_25 = arith.constant 0.000000e+00 : f32
    %113 = vector.broadcast %cst_25 : f32 to vector<1x256xf32>
    %114 = arith.select %112, %15, %113 : vector<1x256xi1>, vector<1x256xf32>
    %115 = arith.select %108, %110, %114 : vector<1x256xi1>, vector<1x256xf32>
    %116 = vector.broadcast %115 : vector<1x256xf32> to vector<16x256xf32>
    %117 = arith.mulf %34, %116 : vector<16x256xf32>
    %c6_i32 = arith.constant 6 : i32
    %118 = vector.broadcast %c6_i32 : i32 to vector<1x256xi32>
    %119 = arith.cmpi eq, %12, %118 : vector<1x256xi32>
    %cst_26 = arith.constant 1.000000e+00 : f32
    %120 = vector.broadcast %cst_26 : f32 to vector<1x256xf32>
    %121 = arith.subf %120, %15 : vector<1x256xf32>
    %c5_i32_27 = arith.constant 5 : i32
    %122 = vector.broadcast %c5_i32_27 : i32 to vector<1x256xi32>
    %123 = arith.cmpi eq, %12, %122 : vector<1x256xi32>
    %cst_28 = arith.constant 0.000000e+00 : f32
    %124 = vector.broadcast %cst_28 : f32 to vector<1x256xf32>
    %125 = arith.select %123, %15, %124 : vector<1x256xi1>, vector<1x256xf32>
    %126 = arith.select %119, %121, %125 : vector<1x256xi1>, vector<1x256xf32>
    %127 = vector.broadcast %126 : vector<1x256xf32> to vector<16x256xf32>
    %128 = arith.mulf %34, %127 : vector<16x256xf32>
    %c7_i32_29 = arith.constant 7 : i32
    %129 = vector.broadcast %c7_i32_29 : i32 to vector<1x256xi32>
    %130 = arith.cmpi eq, %12, %129 : vector<1x256xi32>
    %cst_30 = arith.constant 1.000000e+00 : f32
    %131 = vector.broadcast %cst_30 : f32 to vector<1x256xf32>
    %132 = arith.subf %131, %15 : vector<1x256xf32>
    %c6_i32_31 = arith.constant 6 : i32
    %133 = vector.broadcast %c6_i32_31 : i32 to vector<1x256xi32>
    %134 = arith.cmpi eq, %12, %133 : vector<1x256xi32>
    %cst_32 = arith.constant 0.000000e+00 : f32
    %135 = vector.broadcast %cst_32 : f32 to vector<1x256xf32>
    %136 = arith.select %134, %15, %135 : vector<1x256xi1>, vector<1x256xf32>
    %137 = arith.select %130, %132, %136 : vector<1x256xi1>, vector<1x256xf32>
    %138 = vector.broadcast %137 : vector<1x256xf32> to vector<16x256xf32>
    %139 = arith.mulf %34, %138 : vector<16x256xf32>
    %c8_i32 = arith.constant 8 : i32
    %140 = vector.broadcast %c8_i32 : i32 to vector<1x256xi32>
    %141 = arith.cmpi eq, %12, %140 : vector<1x256xi32>
    %cst_33 = arith.constant 1.000000e+00 : f32
    %142 = vector.broadcast %cst_33 : f32 to vector<1x256xf32>
    %143 = arith.subf %142, %15 : vector<1x256xf32>
    %c7_i32_34 = arith.constant 7 : i32
    %144 = vector.broadcast %c7_i32_34 : i32 to vector<1x256xi32>
    %145 = arith.cmpi eq, %12, %144 : vector<1x256xi32>
    %cst_35 = arith.constant 0.000000e+00 : f32
    %146 = vector.broadcast %cst_35 : f32 to vector<1x256xf32>
    %147 = arith.select %145, %15, %146 : vector<1x256xi1>, vector<1x256xf32>
    %148 = arith.select %141, %143, %147 : vector<1x256xi1>, vector<1x256xf32>
    %149 = vector.broadcast %148 : vector<1x256xf32> to vector<16x256xf32>
    %150 = arith.mulf %34, %149 : vector<16x256xf32>
    %151 = tpu.concatenate %62, %73, %84, %95, %106, %117, %128, %139, %150 in 0 : vector<16x256xf32>, vector<16x256xf32>, vector<16x256xf32>, vector<16x256xf32>, vector<16x256xf32>, vector<16x256xf32>, vector<16x256xf32>, vector<16x256xf32>, vector<16x256xf32> -> vector<144x256xf32>
    %c0_36 = arith.constant 0 : index
    %c0_37 = arith.constant 0 : index
    %c0_38 = arith.constant 0 : index
    %152 = vector.load %arg2[%c0_36, %c0_37, %c0_38] : memref<1x48x144xf32, #tpu.memory_space<vmem>>, vector<1x48x144xf32>
    %153 = vector.shape_cast %152 : vector<1x48x144xf32> to vector<48x144xf32>
    %cst_39 = arith.constant dense<0.000000e+00> : vector<48x256xf32>
    %154 = tpu.matmul %153, %151, %cst_39 {dimension_numbers = #tpu.dot_dimension_numbers<[1], [0], [0], [1], [0, 0, 1, 1], [], []>} : vector<48x144xf32>, vector<144x256xf32>, vector<48x256xf32> -> vector<48x256xf32>
    %155 = vector.extract_strided_slice %154 {offsets = [0, 0], sizes = [16, 256], strides = [1, 1]} : vector<48x256xf32> to vector<16x256xf32>
    %156 = arith.mulf %155, %51 : vector<16x256xf32>
    %cst_40 = arith.constant dense<0.000000e+00> : vector<256xf32>
    %157 = vector.multi_reduction <add>, %156, %cst_40 [0] : vector<16x256xf32> to vector<256xf32>
    %158 = vector.shape_cast %157 : vector<256xf32> to vector<1x256xf32>
    %159 = vector.extract_strided_slice %154 {offsets = [16, 0], sizes = [16, 256], strides = [1, 1]} : vector<48x256xf32> to vector<16x256xf32>
    %160 = arith.mulf %159, %51 : vector<16x256xf32>
    %cst_41 = arith.constant dense<0.000000e+00> : vector<256xf32>
    %161 = vector.multi_reduction <add>, %160, %cst_41 [0] : vector<16x256xf32> to vector<256xf32>
    %162 = vector.shape_cast %161 : vector<256xf32> to vector<1x256xf32>
    %163 = vector.extract_strided_slice %154 {offsets = [32, 0], sizes = [16, 256], strides = [1, 1]} : vector<48x256xf32> to vector<16x256xf32>
    %164 = arith.mulf %163, %51 : vector<16x256xf32>
    %cst_42 = arith.constant dense<0.000000e+00> : vector<256xf32>
    %165 = vector.multi_reduction <add>, %164, %cst_42 [0] : vector<16x256xf32> to vector<256xf32>
    %166 = vector.shape_cast %165 : vector<256xf32> to vector<1x256xf32>
    %167 = tpu.concatenate %158, %162, %166 in 0 : vector<1x256xf32>, vector<1x256xf32>, vector<1x256xf32> -> vector<3x256xf32>
    %c0_43 = arith.constant 0 : index
    %c0_44 = arith.constant 0 : index
    %c0_45 = arith.constant 0 : index
    %168 = vector.load %arg4[%c0_43, %c0_44, %c0_45] : memref<1x3x256xf32, #tpu.memory_space<vmem>>, vector<1x3x256xf32>
    %169 = vector.shape_cast %168 : vector<1x3x256xf32> to vector<3x256xf32>
    %170 = vector.shape_cast %167 : vector<3x256xf32> to vector<1x3x256xf32>
    tpu.vector_store %arg4[%c0_43, %c0_44, %c0_45], %170 {strides = array<i32>} : memref<1x3x256xf32, #tpu.memory_space<vmem>>, vector<1x3x256xf32>,
    return
  }
  func.func @transform_0(%arg0: i32, %arg1: i32) -> (i32, i32, i32) {
    %c0_i32 = arith.constant 0 : i32
    %c0_i32_0 = arith.constant 0 : i32
    %c0_i32_1 = arith.constant 0 : i32
    return %arg0, %c0_i32, %c0_i32_0 : i32, i32, i32
  }
  func.func @transform_1(%arg0: i32, %arg1: i32) -> (i32, i32, i32) {
    %c0_i32 = arith.constant 0 : i32
    %c0_i32_0 = arith.constant 0 : i32
    return %arg0, %c0_i32, %arg1 : i32, i32, i32
  }
  func.func @transform_2(%arg0: i32, %arg1: i32) -> (i32, i32, i32) {
    %c0_i32 = arith.constant 0 : i32
    %c0_i32_0 = arith.constant 0 : i32
    return %arg0, %c0_i32, %arg1 : i32, i32, i32
  }
}

</mosaic_0001>

<llo_original>
// kernel: tpu_custom_call.1
$region0: #{tpu_custom_call.1}
  #allocation0 [shape = 'u32[]', space=smem, size = 0x4, offset = 0x4, fixed_abs, tag = 'smem constant byte address 0x4 - core index']
  #allocation1 [shape = 'u32[144,128]{1,0:T(1,128)}', space=vmem, size = 0x12000, scoped, tag = 'internal scratch']
  %s0 = inlined_call_operand.hbm [shape: f32[2,48,144], index: 0, kind: input, shape index: {}]
  %s1 = inlined_call_operand.vmem [shape: f32[2,3,256], index: 1, kind: input, shape index: {}]
  %s2 = inlined_call_operand.vmem [shape: f32[2,3,256], index: 2, kind: output, shape index: {}]
  %s3 = sld [smem:[#allocation0]]
  $region45: #{tpu_custom_call.1} parent=0
    _
  %s5 = ssub.s32 1, %s3
  %s6 = scalar_select 0, %s5, %s3
  $region1: #{tpu_custom_call.1} parent=0
    #allocation2 [shape = 'u8[98304]{0}', space=vmem, size = 0x18000, scoped, tag = 'input window, operand 0']
    #allocation3 [shape = 's32[2]{0}', space=sflag, size = 0x8, scoped, tag = 'scoped memory for tpu_custom_call.1']
    %7 = vsyncpa [#allocation3], 0
    %s8 = scalar_lea.sflag [#allocation3], 1
    %9 = vsyncpa %s8, 0
    loop: start=0, step=1, limit=4
    $region2: #{tpu_custom_call.1} parent=1 // loop_pre_header
      _
    $region3: #{tpu_custom_call.1} parent=1 // loop_header
      %s11 = sphi 0, %s15
      %p12 = scmp.ge.s32.totalorder %s11, 4
      %s18 = sphi 0, %s30
      %s19 = sphi 0, %s26
      %s20 = sphi 0, %s18
      %s21 = sphi 0, %s19
      %s22 = sphi 0, %s20
      %s23 = sphi 0, %s21
      %s33 = sphi 0, %s35
      %s36 = sphi 0, %s33
      %s37 = sphi 0, %s36
      %s53 = sphi 0, %s37
      %s61 = sphi 0, %s63
      %s64 = sphi 0, %s61
      %s65 = sphi 0, %s64
      %s81 = sphi 0, %s65
      %s89 = sphi 0, %s91
      %s92 = sphi 0, %s89
      %s93 = sphi 0, %s92
      %s109 = sphi 0, %s93
    $region4: #{tpu_custom_call.1} parent=1 // loop_header_branch
      %14 = sbr.rel (%p12) target = $region8
    $region5: #{tpu_custom_call.1} parent=1 // loop_body
      %s16 = ssub.s32 %s11, 1
      %s17 = ssub.s32 %s11, 2
      %s24 = sadd.s32 1, %s19
      %p25 = scmp.ge.s32.totalorder %s24, 1
      %s26 = scalar_select %p25, 0, %s24
      %s27 = sadd.s32 1, %s18
      %s28 = scalar_select %p25, %s27, %s18
      %p29 = scmp.ge.s32.totalorder %s28, 2
      %s30 = scalar_select %p29, 0, %s28
      %s31 = ssub.s32 %s18, %s30
      %p32 = scmp.eq.s32.totalorder %s31, 0
      %s34 = sadd.s32 %s33, 1
      %s35 = scalar_select %p32, %s33, %s34
      %p38 = pneg %p32
      %p39 = scmp.eq.s32.totalorder %s11, 1
      %p40 = por %p38, %p39
      %p41 = scmp.ne.s32.totalorder %s33, %s36
      %p42 = scmp.eq.s32.totalorder %s11, 0
      %p43 = por %p41, %p42
      %p44 = scmp.ne.s32.totalorder %s33, %s36
      %p45 = scmp.eq.s32.totalorder %s16, 1
      %p46 = por %p44, %p45
      %p47 = scmp.ne.s32.totalorder %s36, %s37
      %p48 = scmp.eq.s32.totalorder %s16, 0
      %p49 = por %p47, %p48
      %p50 = scmp.ne.s32.totalorder %s36, %s37
      %p51 = scmp.eq.s32.totalorder %s17, 1
      %p52 = por %p50, %p51
      %p54 = scmp.ne.s32.totalorder %s37, %s53
      %p55 = scmp.eq.s32.totalorder %s17, 0
      %p56 = por %p54, %p55
      %s57 = ssub.s32 %s18, %s30
      %s58 = ssub.s32 %s19, %s26
      %s59 = sor.u32 %s57, %s58
      %p60 = scmp.eq.s32.totalorder %s59, 0
      %s62 = sadd.s32 %s61, 1
      %s63 = scalar_select %p60, %s61, %s62
      %p66 = pneg %p60
      %p67 = scmp.eq.s32.totalorder %s11, 1
      %p68 = por %p66, %p67
      %p69 = scmp.ne.s32.totalorder %s61, %s64
      %p70 = scmp.eq.s32.totalorder %s11, 0
      %p71 = por %p69, %p70
      %p72 = scmp.ne.s32.totalorder %s61, %s64
      %p73 = scmp.eq.s32.totalorder %s16, 1
      %p74 = por %p72, %p73
      %p75 = scmp.ne.s32.totalorder %s64, %s65
      %p76 = scmp.eq.s32.totalorder %s16, 0
      %p77 = por %p75, %p76
      %p78 = scmp.ne.s32.totalorder %s64, %s65
      %p79 = scmp.eq.s32.totalorder %s17, 1
      %p80 = por %p78, %p79
      %p82 = scmp.ne.s32.totalorder %s65, %s81
      %p83 = scmp.eq.s32.totalorder %s17, 0
      %p84 = por %p82, %p83
      %s85 = ssub.s32 %s18, %s30
      %s86 = ssub.s32 %s19, %s26
      %s87 = sor.u32 %s85, %s86
      %p88 = scmp.eq.s32.totalorder %s87, 0
      %s90 = sadd.s32 %s89, 1
      %s91 = scalar_select %p88, %s89, %s90
      %p94 = pneg %p88
      %p95 = scmp.eq.s32.totalorder %s11, 1
      %p96 = por %p94, %p95
      %p97 = scmp.ne.s32.totalorder %s89, %s92
      %p98 = scmp.eq.s32.totalorder %s11, 0
      %p99 = por %p97, %p98
      %p100 = scmp.ne.s32.totalorder %s89, %s92
      %p101 = scmp.eq.s32.totalorder %s16, 1
      %p102 = por %p100, %p101
      %p103 = scmp.ne.s32.totalorder %s92, %s93
      %p104 = scmp.eq.s32.totalorder %s16, 0
      %p105 = por %p103, %p104
      %p106 = scmp.ne.s32.totalorder %s92, %s93
      %p107 = scmp.eq.s32.totalorder %s17, 1
      %p108 = por %p106, %p107
      %p110 = scmp.ne.s32.totalorder %s93, %s109
      %p111 = scmp.eq.s32.totalorder %s17, 0
      %p112 = por %p110, %p111
      %p113 = scmp.le.s32.totalorder 1, %s11
      %p114 = scmp.lt.s32.totalorder %s11, 3
      %p115 = pnand %p113, %p114
      %p116 = pneg %p115
      // Predicated region
      $region9: #{tpu_custom_call.1} parent=5 // pred_check
        _
      $region10: #{tpu_custom_call.1} parent=5 // pred_check_branch
        %118 = sbr.rel (%p115) target = $region12
      $region11: #{tpu_custom_call.1} parent=5 // pred_region
        %s119 = ssub.s32 %s11, 1
      $region12: #{tpu_custom_call.1} parent=5 // pred_fallthru
        _
      %p120 = scmp.lt.s32.totalorder %s11, 2
      // Predicated region
      $region13: #{tpu_custom_call.1} parent=5 // pred_check
        %p121 = pneg %p120
      $region14: #{tpu_custom_call.1} parent=5 // pred_check_branch
        %123 = sbr.rel (%p121) target = $region16
      $region15: #{tpu_custom_call.1} parent=5 // pred_region
        // Predicated region
        $region17: #{tpu_custom_call.1} parent=15 // pred_check
          %p124 = pneg %p43
        $region18: #{tpu_custom_call.1} parent=15 // pred_check_branch
          %126 = sbr.rel (%p124) target = $region20
        $region19: #{tpu_custom_call.1} parent=15 // pred_region
          %s127 = sand.u32 %s33, 1
          %s128 = scalar_lea.sflag [#allocation3], %s127
          %s129 = sand.u32 %s33, 1
          %s130 = smul.addr %s129, 96
          %s131 = scalar_lea.vmem [#allocation2], %s130
          %s133 = ssub.s32 1536, 1536
          %134 = vsyncadd %s128, %s133
          %s135 = smul.addr %s18, 12
          %s136 = smul.addr %s135, 128
          %s137 = scalar_lea.hbm %s0, %s136
          %s138 = sshll.u32 %s131, 4
          %s139 = int_to_ptr.vmem [resolvable:$true] %s138
          %144 = dma.hbm_to_vmem [thread:$0]  %s137, 1536, %s139, %s128, 256, 256, 16
        $region20: #{tpu_custom_call.1} parent=15 // pred_fallthru
          _
        // Predicated region
        $region21: #{tpu_custom_call.1} parent=15 // pred_check
          %p145 = pneg %p71
        $region22: #{tpu_custom_call.1} parent=15 // pred_check_branch
          %147 = sbr.rel (%p145) target = $region24
        $region23: #{tpu_custom_call.1} parent=15 // pred_region
          %s148 = smul.u32 2, %s19
          %p149 = scmp.lt.s32.totalorder %s18, 1
          %s150 = scalar_select %p149, %s18, 1
          %p151 = scmp.lt.s32.totalorder %s148, 1
          %s152 = scalar_select %p151, %s148, 1
          %s153 = smul.addr %s150, 2
          %s154 = sadd.s32 %s152, %s153
          %s155 = smul.addr %s154, 4
          %s156 = scalar_lea.vmem %s1, %s155
          %s157 = smul.u32 2, %s19
        $region24: #{tpu_custom_call.1} parent=15 // pred_fallthru
          _
      $region16: #{tpu_custom_call.1} parent=5 // pred_fallthru
        _
      %p158 = scmp.le.s32.totalorder 1, %s11
      %p159 = scmp.lt.s32.totalorder %s11, 3
      %p160 = pnand %p158, %p159
      %p161 = pneg %p160
      // Predicated region
      $region25: #{tpu_custom_call.1} parent=5 // pred_check
        _
      $region26: #{tpu_custom_call.1} parent=5 // pred_check_branch
        %163 = sbr.rel (%p160) target = $region28
      $region27: #{tpu_custom_call.1} parent=5 // pred_region
        %s164 = ssub.s32 %s11, 1
        %s165 = sand.u32 %s36, 1
        %s166 = scalar_lea.sflag [#allocation3], %s165
        %s167 = sand.u32 %s36, 1
        %s168 = smul.addr %s167, 96
        %s169 = scalar_lea.vmem [#allocation2], %s168
        // Predicated region
        $region29: #{tpu_custom_call.1} parent=27 // pred_check
          %p170 = pneg %p49
        $region30: #{tpu_custom_call.1} parent=27 // pred_check_branch
          %172 = sbr.rel (%p170) target = $region32
        $region31: #{tpu_custom_call.1} parent=27 // pred_region
          %173 = dma.done %s166, 1536
        $region32: #{tpu_custom_call.1} parent=27 // pred_fallthru
          _
        %s174 = sand.u32 %s36, 1
        %s175 = scalar_lea.sflag [#allocation3], %s174
        %s176 = sand.u32 %s36, 1
        %s177 = smul.addr %s176, 96
        %s178 = scalar_lea.vmem [#allocation2], %s177
        %p179 = pneg %p49
        %p180 = pneg %p46
        %s181 = smul.u32 2, %s21
        %p182 = scmp.lt.s32.totalorder %s20, 1
        %s183 = scalar_select %p182, %s20, 1
        %p184 = scmp.lt.s32.totalorder %s181, 1
        %s185 = scalar_select %p184, %s181, 1
        %s186 = smul.addr %s183, 2
        %s187 = sadd.s32 %s185, %s186
        %s188 = smul.addr %s187, 4
        %s189 = scalar_lea.vmem %s1, %s188
        %p190 = pneg %p77
        %p191 = pneg %p74
        %p192 = pneg %p105
        %p193 = pneg %p102
        %s194 = smul.u32 2, %s21
        %p195 = scmp.lt.s32.totalorder %s20, 1
        %s196 = scalar_select %p195, %s20, 1
        %p197 = scmp.lt.s32.totalorder %s194, 1
        %s198 = scalar_select %p197, %s194, 1
        %s199 = smul.addr %s196, 2
        %s200 = sadd.s32 %s198, %s199
        %s201 = smul.addr %s200, 4
        %s202 = scalar_lea.vmem %s2, %s201
        %s203 = smul.u32 2, %s21
        %p204 = scmp.lt.s32.totalorder %s20, 1
        %s205 = scalar_select %p204, %s20, 1
        %p206 = scmp.lt.s32.totalorder %s203, 1
        %s207 = scalar_select %p206, %s203, 1
        %s208 = smul.addr %s205, 2
        %s209 = sadd.s32 %s207, %s208
        %s210 = smul.addr %s209, 4
        %s211 = scalar_lea.vmem %s1, %s210
        %s212 = smul.u32 2, %s21
        %s213 = smul.u32 2, %s21
        %p214 = scmp.lt.s32.totalorder %s20, 1
        %s215 = scalar_select %p214, %s20, 1
        %p216 = scmp.lt.s32.totalorder %s213, 1
        %s217 = scalar_select %p216, %s213, 1
        %s218 = smul.addr %s215, 2
        %s219 = sadd.s32 %s217, %s218
        %s220 = smul.addr %s219, 4
        %s221 = scalar_lea.vmem %s2, %s220
        %s222 = smul.u32 2, %s21
        %v223 = vld [vmem:[%s211] sm:$0x77]
        %v224 = vmul.f32 %v223, 7.999992
        %v225 = vfloor.f32 %v224
        %v226 = vsub.f32 %v224, %v225
        %v227 = vcvt.f32.s32.to.zero.pseudo %v225
        %vm228 = vcmp.gt.s32.totalorder %v227, 0
        %v229 = vsel %vm228, %v227, 0
        %vm230 = vcmp.lt.s32.totalorder %v229, 7
        %v231 = vsel %vm230, %v229, 7
        %v232 = vlaneseq
        %v233 = vshrl.u32 %v232, 7
        %v234 = vadd.s32 %v233, 8
        %v235 = vlaneseq
        %v236 = vshrl.u32 %v235, 7
        %v237 = vsub.s32 0, %v236
        %v238 = vrot.slane %v231, %v237
        %v239 = vlaneseq
        %v240 = vshrl.u32 %v239, 7
        %v241 = vsub.s32 4, %v240
        %v242 = vrot.slane %v231, %v241
        %v243 = vlaneseq
        %v244 = vshrl.u32 %v243, 7
        %v245 = vsub.s32 0, %v244
        %v246 = vrot.slane %v238, %v245
        %v247 = vlaneseq
        %v248 = vshrl.u32 %v247, 7
        %v249 = vsub.s32 0, %v248
        %v250 = vrot.slane %v242, %v249
        %vm251 = vcmp.eq.s32.totalorder %v233, %v246
        %vm252 = vcmp.eq.s32.totalorder %v233, %v250
        %vm253 = vcmp.eq.s32.totalorder %v234, %v246
        %vm254 = vcmp.eq.s32.totalorder %v234, %v250
        %v255 = vsub.f32 1.0, %v226
        %v256 = vadd.s32 %v231, 1
        %v257 = vlaneseq
        %v258 = vshrl.u32 %v257, 7
        %v259 = vsub.s32 0, %v258
        %v260 = vrot.slane %v256, %v259
        %v261 = vlaneseq
        %v262 = vshrl.u32 %v261, 7
        %v263 = vsub.s32 4, %v262
        %v264 = vrot.slane %v256, %v263
        %v265 = vlaneseq
        %v266 = vshrl.u32 %v265, 7
        %v267 = vsub.s32 0, %v266
        %v268 = vrot.slane %v260, %v267
        %v269 = vlaneseq
        %v270 = vshrl.u32 %v269, 7
        %v271 = vsub.s32 0, %v270
        %v272 = vrot.slane %v264, %v271
        %vm273 = vcmp.eq.s32.totalorder %v233, %v268
        %vm274 = vcmp.eq.s32.totalorder %v233, %v272
        %vm275 = vcmp.eq.s32.totalorder %v234, %v268
        %vm276 = vcmp.eq.s32.totalorder %v234, %v272
        %v278 = vlaneseq
        %v279 = vshrl.u32 %v278, 7
        %v280 = vsub.s32 0, %v279
        %v281 = vrot.slane %v226, %v280
        %v282 = vlaneseq
        %v283 = vshrl.u32 %v282, 7
        %v284 = vsub.s32 4, %v283
        %v285 = vrot.slane %v226, %v284
        %v288 = vlaneseq
        %v289 = vshrl.u32 %v288, 7
        %v290 = vsub.s32 0, %v289
        %v291 = vrot.slane %v281, %v290
        %v292 = vlaneseq
        %v293 = vshrl.u32 %v292, 7
        %v294 = vsub.s32 0, %v293
        %v295 = vrot.slane %v285, %v294
        %v296 = vsel %vm273, %v291, 0.0
        %v297 = vsel %vm274, %v295, 0.0
        %v298 = vsel %vm275, %v291, 0.0
        %v299 = vsel %vm276, %v295, 0.0
        %v301 = vlaneseq
        %v302 = vshrl.u32 %v301, 7
        %v303 = vsub.s32 0, %v302
        %v304 = vrot.slane %v255, %v303
        %v305 = vlaneseq
        %v306 = vshrl.u32 %v305, 7
        %v307 = vsub.s32 4, %v306
        %v308 = vrot.slane %v255, %v307
        %v311 = vlaneseq
        %v312 = vshrl.u32 %v311, 7
        %v313 = vsub.s32 0, %v312
        %v314 = vrot.slane %v304, %v313
        %v315 = vlaneseq
        %v316 = vshrl.u32 %v315, 7
        %v317 = vsub.s32 0, %v316
        %v318 = vrot.slane %v308, %v317
        %v319 = vsel %vm251, %v314, %v296
        %v320 = vsel %vm252, %v318, %v297
        %v321 = vsel %vm253, %v314, %v298
        %v322 = vsel %vm254, %v318, %v299
        %v323 = vlaneseq
        %v324 = vshrl.u32 %v323, 7
        %v325 = vsub.s32 2, %v324
        %v326 = vrot.slane %v231, %v325
        %v327 = vlaneseq
        %v328 = vshrl.u32 %v327, 7
        %v329 = vsub.s32 6, %v328
        %v330 = vrot.slane %v231, %v329
        %v331 = vlaneseq
        %v332 = vshrl.u32 %v331, 7
        %v333 = vsub.s32 2, %v332
        %v334 = vrot.slane %v326, %v333
        %v335 = vlaneseq
        %v336 = vshrl.u32 %v335, 7
        %v337 = vsub.s32 2, %v336
        %v338 = vrot.slane %v330, %v337
        %vm339 = vcmp.eq.s32.totalorder %v233, %v334
        %vm340 = vcmp.eq.s32.totalorder %v233, %v338
        %vm341 = vcmp.eq.s32.totalorder %v234, %v334
        %vm342 = vcmp.eq.s32.totalorder %v234, %v338
        %v343 = vlaneseq
        %v344 = vshrl.u32 %v343, 7
        %v345 = vsub.s32 2, %v344
        %v346 = vrot.slane %v256, %v345
        %v347 = vlaneseq
        %v348 = vshrl.u32 %v347, 7
        %v349 = vsub.s32 6, %v348
        %v350 = vrot.slane %v256, %v349
        %v351 = vlaneseq
        %v352 = vshrl.u32 %v351, 7
        %v353 = vsub.s32 2, %v352
        %v354 = vrot.slane %v346, %v353
        %v355 = vlaneseq
        %v356 = vshrl.u32 %v355, 7
        %v357 = vsub.s32 2, %v356
        %v358 = vrot.slane %v350, %v357
        %vm359 = vcmp.eq.s32.totalorder %v233, %v354
        %vm360 = vcmp.eq.s32.totalorder %v233, %v358
        %vm361 = vcmp.eq.s32.totalorder %v234, %v354
        %vm362 = vcmp.eq.s32.totalorder %v234, %v358
        %v363 = vlaneseq
        %v364 = vshrl.u32 %v363, 7
        %v365 = vsub.s32 2, %v364
        %v366 = vrot.slane %v226, %v365
        %v367 = vlaneseq
        %v368 = vshrl.u32 %v367, 7
        %v369 = vsub.s32 6, %v368
        %v370 = vrot.slane %v226, %v369
        %v373 = vlaneseq
        %v374 = vshrl.u32 %v373, 7
        %v375 = vsub.s32 2, %v374
        %v376 = vrot.slane %v366, %v375
        %v377 = vlaneseq
        %v378 = vshrl.u32 %v377, 7
        %v379 = vsub.s32 2, %v378
        %v380 = vrot.slane %v370, %v379
        %v381 = vsel %vm359, %v376, 0.0
        %v382 = vsel %vm360, %v380, 0.0
        %v383 = vsel %vm361, %v376, 0.0
        %v384 = vsel %vm362, %v380, 0.0
        %v385 = vlaneseq
        %v386 = vshrl.u32 %v385, 7
        %v387 = vsub.s32 2, %v386
        %v388 = vrot.slane %v255, %v387
        %v389 = vlaneseq
        %v390 = vshrl.u32 %v389, 7
        %v391 = vsub.s32 6, %v390
        %v392 = vrot.slane %v255, %v391
        %v395 = vlaneseq
        %v396 = vshrl.u32 %v395, 7
        %v397 = vsub.s32 2, %v396
        %v398 = vrot.slane %v388, %v397
        %v399 = vlaneseq
        %v400 = vshrl.u32 %v399, 7
        %v401 = vsub.s32 2, %v400
        %v402 = vrot.slane %v392, %v401
        %v403 = vsel %vm339, %v398, %v381
        %v404 = vsel %vm340, %v402, %v382
        %v405 = vsel %vm341, %v398, %v383
        %v406 = vsel %vm342, %v402, %v384
        %vm407 = vcmp.eq.s32.totalorder %v231, 0
        %vm408 = vcmp.eq.s32.totalorder %v231, 4294967295
        %v409 = vsel %vm408, %v226, 0.0
        %v410 = vsel %vm407, %v255, %v409
        %v412 = vlaneseq
        %v413 = vshrl.u32 %v412, 7
        %v414 = vsub.s32 1, %v413
        %v415 = vrot.slane %v410, %v414
        %v416 = vlaneseq
        %v417 = vshrl.u32 %v416, 7
        %v418 = vsub.s32 5, %v417
        %v419 = vrot.slane %v410, %v418
        %v422 = vlaneseq
        %v423 = vshrl.u32 %v422, 7
        %v424 = vsub.s32 1, %v423
        %v425 = vrot.slane %v415, %v424
        %v426 = vlaneseq
        %v427 = vshrl.u32 %v426, 7
        %v428 = vsub.s32 1, %v427
        %v429 = vrot.slane %v419, %v428
        %v430 = vmul.f32 %v319, %v425
        %v431 = vmul.f32 %v320, %v429
        %v432 = vmul.f32 %v321, %v425
        %v433 = vmul.f32 %v322, %v429
        %vm434 = vcmp.eq.s32.totalorder %v231, 1
        %v435 = vsel %vm407, %v226, 0.0
        %v436 = vsel %vm434, %v255, %v435
        %v438 = vlaneseq
        %v439 = vshrl.u32 %v438, 7
        %v440 = vsub.s32 1, %v439
        %v441 = vrot.slane %v436, %v440
        %v442 = vlaneseq
        %v443 = vshrl.u32 %v442, 7
        %v444 = vsub.s32 5, %v443
        %v445 = vrot.slane %v436, %v444
        %v448 = vlaneseq
        %v449 = vshrl.u32 %v448, 7
        %v450 = vsub.s32 1, %v449
        %v451 = vrot.slane %v441, %v450
        %v452 = vlaneseq
        %v453 = vshrl.u32 %v452, 7
        %v454 = vsub.s32 1, %v453
        %v455 = vrot.slane %v445, %v454
        %v456 = vmul.f32 %v319, %v451
        %v457 = vmul.f32 %v320, %v455
        %v458 = vmul.f32 %v321, %v451
        %v459 = vmul.f32 %v322, %v455
        %vm460 = vcmp.eq.s32.totalorder %v231, 2
        %v461 = vsel %vm434, %v226, 0.0
        %v462 = vsel %vm460, %v255, %v461
        %v464 = vlaneseq
        %v465 = vshrl.u32 %v464, 7
        %v466 = vsub.s32 1, %v465
        %v467 = vrot.slane %v462, %v466
        %v468 = vlaneseq
        %v469 = vshrl.u32 %v468, 7
        %v470 = vsub.s32 5, %v469
        %v471 = vrot.slane %v462, %v470
        %v474 = vlaneseq
        %v475 = vshrl.u32 %v474, 7
        %v476 = vsub.s32 1, %v475
        %v477 = vrot.slane %v467, %v476
        %v478 = vlaneseq
        %v479 = vshrl.u32 %v478, 7
        %v480 = vsub.s32 1, %v479
        %v481 = vrot.slane %v471, %v480
        %v482 = vmul.f32 %v319, %v477
        %v483 = vmul.f32 %v320, %v481
        %v484 = vmul.f32 %v321, %v477
        %v485 = vmul.f32 %v322, %v481
        %vm486 = vcmp.eq.s32.totalorder %v231, 3
        %v487 = vsel %vm460, %v226, 0.0
        %v488 = vsel %vm486, %v255, %v487
        %v490 = vlaneseq
        %v491 = vshrl.u32 %v490, 7
        %v492 = vsub.s32 1, %v491
        %v493 = vrot.slane %v488, %v492
        %v494 = vlaneseq
        %v495 = vshrl.u32 %v494, 7
        %v496 = vsub.s32 5, %v495
        %v497 = vrot.slane %v488, %v496
        %v500 = vlaneseq
        %v501 = vshrl.u32 %v500, 7
        %v502 = vsub.s32 1, %v501
        %v503 = vrot.slane %v493, %v502
        %v504 = vlaneseq
        %v505 = vshrl.u32 %v504, 7
        %v506 = vsub.s32 1, %v505
        %v507 = vrot.slane %v497, %v506
        %v508 = vmul.f32 %v319, %v503
        %v509 = vmul.f32 %v320, %v507
        %v510 = vmul.f32 %v321, %v503
        %v511 = vmul.f32 %v322, %v507
        %vm512 = vcmp.eq.s32.totalorder %v231, 4
        %v513 = vsel %vm486, %v226, 0.0
        %v514 = vsel %vm512, %v255, %v513
        %v516 = vlaneseq
        %v517 = vshrl.u32 %v516, 7
        %v518 = vsub.s32 1, %v517
        %v519 = vrot.slane %v514, %v518
        %v520 = vlaneseq
        %v521 = vshrl.u32 %v520, 7
        %v522 = vsub.s32 5, %v521
        %v523 = vrot.slane %v514, %v522
        %v526 = vlaneseq
        %v527 = vshrl.u32 %v526, 7
        %v528 = vsub.s32 1, %v527
        %v529 = vrot.slane %v519, %v528
        %v530 = vlaneseq
        %v531 = vshrl.u32 %v530, 7
        %v532 = vsub.s32 1, %v531
        %v533 = vrot.slane %v523, %v532
        %v534 = vmul.f32 %v319, %v529
        %v535 = vmul.f32 %v320, %v533
        %v536 = vmul.f32 %v321, %v529
        %v537 = vmul.f32 %v322, %v533
        %vm538 = vcmp.eq.s32.totalorder %v231, 5
        %v539 = vsel %vm512, %v226, 0.0
        %v540 = vsel %vm538, %v255, %v539
        %v542 = vlaneseq
        %v543 = vshrl.u32 %v542, 7
        %v544 = vsub.s32 1, %v543
        %v545 = vrot.slane %v540, %v544
        %v546 = vlaneseq
        %v547 = vshrl.u32 %v546, 7
        %v548 = vsub.s32 5, %v547
        %v549 = vrot.slane %v540, %v548
        %v552 = vlaneseq
        %v553 = vshrl.u32 %v552, 7
        %v554 = vsub.s32 1, %v553
        %v555 = vrot.slane %v545, %v554
        %v556 = vlaneseq
        %v557 = vshrl.u32 %v556, 7
        %v558 = vsub.s32 1, %v557
        %v559 = vrot.slane %v549, %v558
        %v560 = vmul.f32 %v319, %v555
        %v561 = vmul.f32 %v320, %v559
        %v562 = vmul.f32 %v321, %v555
        %v563 = vmul.f32 %v322, %v559
        %vm564 = vcmp.eq.s32.totalorder %v231, 6
        %v565 = vsel %vm538, %v226, 0.0
        %v566 = vsel %vm564, %v255, %v565
        %v568 = vlaneseq
        %v569 = vshrl.u32 %v568, 7
        %v570 = vsub.s32 1, %v569
        %v571 = vrot.slane %v566, %v570
        %v572 = vlaneseq
        %v573 = vshrl.u32 %v572, 7
        %v574 = vsub.s32 5, %v573
        %v575 = vrot.slane %v566, %v574
        %v578 = vlaneseq
        %v579 = vshrl.u32 %v578, 7
        %v580 = vsub.s32 1, %v579
        %v581 = vrot.slane %v571, %v580
        %v582 = vlaneseq
        %v583 = vshrl.u32 %v582, 7
        %v584 = vsub.s32 1, %v583
        %v585 = vrot.slane %v575, %v584
        %v586 = vmul.f32 %v319, %v581
        %v587 = vmul.f32 %v320, %v585
        %v588 = vmul.f32 %v321, %v581
        %v589 = vmul.f32 %v322, %v585
        %vm590 = vcmp.eq.s32.totalorder %v231, 7
        %v591 = vsel %vm564, %v226, 0.0
        %v592 = vsel %vm590, %v255, %v591
        %v594 = vlaneseq
        %v595 = vshrl.u32 %v594, 7
        %v596 = vsub.s32 1, %v595
        %v597 = vrot.slane %v592, %v596
        %v598 = vlaneseq
        %v599 = vshrl.u32 %v598, 7
        %v600 = vsub.s32 5, %v599
        %v601 = vrot.slane %v592, %v600
        %v604 = vlaneseq
        %v605 = vshrl.u32 %v604, 7
        %v606 = vsub.s32 1, %v605
        %v607 = vrot.slane %v597, %v606
        %v608 = vlaneseq
        %v609 = vshrl.u32 %v608, 7
        %v610 = vsub.s32 1, %v609
        %v611 = vrot.slane %v601, %v610
        %v612 = vmul.f32 %v319, %v607
        %v613 = vmul.f32 %v320, %v611
        %v614 = vmul.f32 %v321, %v607
        %v615 = vmul.f32 %v322, %v611
        %vm616 = vcmp.eq.s32.totalorder %v231, 8
        %v617 = vsel %vm590, %v226, 0.0
        %v618 = vsel %vm616, %v255, %v617
        %v620 = vlaneseq
        %v621 = vshrl.u32 %v620, 7
        %v622 = vsub.s32 1, %v621
        %v623 = vrot.slane %v618, %v622
        %v624 = vlaneseq
        %v625 = vshrl.u32 %v624, 7
        %v626 = vsub.s32 5, %v625
        %v627 = vrot.slane %v618, %v626
        %v630 = vlaneseq
        %v631 = vshrl.u32 %v630, 7
        %v632 = vsub.s32 1, %v631
        %v633 = vrot.slane %v623, %v632
        %v634 = vlaneseq
        %v635 = vshrl.u32 %v634, 7
        %v636 = vsub.s32 1, %v635
        %v637 = vrot.slane %v627, %v636
        %v638 = vmul.f32 %v319, %v633
        %v639 = vmul.f32 %v320, %v637
        %v640 = vmul.f32 %v321, %v633
        %v641 = vmul.f32 %v322, %v637
        %v642 = vld [vmem:[%s169] sm:$0xff]
        %v643 = vld [vmem:[%s169 + $0x8] sm:$0xff]
        %v644 = vld [vmem:[%s169 + $0x10] sm:$0xff]
        %v645 = vld [vmem:[%s169 + $0x18] sm:$0xff]
        %v646 = vld [vmem:[%s169 + $0x20] sm:$0xff]
        %v647 = vld [vmem:[%s169 + $0x28] sm:$0xff]
        %v648 = vld [vmem:[%s169 + $0x30] sm:$0xff]
        %v649 = vld [vmem:[%s169 + $0x38] sm:$0xff]
        %v650 = vld [vmem:[%s169 + $0x40] sm:$0xff]
        %v651 = vld [vmem:[%s169 + $0x48] sm:$0xff]
        %v652 = vld [vmem:[%s169 + $0x50] sm:$0xff]
        %v653 = vld [vmem:[%s169 + $0x58] sm:$0xff]
        %vm654 = vcmask 130048
        %v656 = vsel %vm654, %v643, 0
        %v659 = vsel %vm654, %v645, 0
        %v662 = vsel %vm654, %v647, 0
        %v665 = vsel %vm654, %v649, 0
        %v668 = vsel %vm654, %v651, 0
        %v671 = vsel %vm654, %v653, 0
        %673 = vmatprep.subr.mxu0 %v431
        %674 = vmatpush1.msra.mxu0 %v430
        %675 = vmatprep.subr.mxu0 %v433
        %676 = vmatpush1.msra.mxu0 %v432
        %677 = vmatprep.subr.mxu0 %v457
        %678 = vmatpush1.msra.mxu0 %v456
        %679 = vmatprep.subr.mxu0 %v459
        %680 = vmatpush1.msra.mxu0 %v458
        %681 = vmatprep.subr.mxu0 %v483
        %682 = vmatpush1.msra.mxu0 %v482
        %683 = vmatprep.subr.mxu0 %v485
        %684 = vmatpush1.msra.mxu0 %v484
        %685 = vmatprep.subr.mxu0 %v509
        %686 = vmatpush1.msra.mxu0 %v508
        %687 = vmatprep.subr.mxu0 %v511
        %688 = vmatpush1.msra.mxu0 %v510
        %689 = vmatprep.subr.mxu0 %v535
        %690 = vmatpush1.msra.mxu0 %v534
        %691 = vmatprep.subr.mxu0 %v537
        %692 = vmatpush1.msra.mxu0 %v536
        %693 = vmatprep.subr.mxu0 %v561
        %694 = vmatpush1.msra.mxu0 %v560
        %695 = vmatprep.subr.mxu0 %v563
        %696 = vmatpush1.msra.mxu0 %v562
        %697 = vmatprep.subr.mxu0 %v587
        %698 = vmatpush1.msra.mxu0 %v586
        %699 = vmatprep.subr.mxu0 %v589
        %700 = vmatpush1.msra.mxu0 %v588
        %701 = vmatprep.subr.mxu0 %v613
        %702 = vmatpush1.msra.mxu0 %v612
        %703 = vmatprep.subr.mxu0 %v615
        %704 = vmatpush1.msra.mxu0 %v614
        %705 = vmatprep.subr.mxu0 %v639
        %706 = vmatpush1.msra.mxu0 %v638
        %707 = vmatprep.subr.mxu0 %v641
        %708 = vmatpush1.msra.mxu0 %v640
        %709 = vmatprep.subr.mxu0 0.0
        %710 = vmatpush1.msra.mxu0 0.0
        %711 = vmatprep.subr.mxu0 0.0
        %712 = vmatpush1.msra.mxu0 0.0
        %713 = vmatprep.subr.mxu0 0.0
        %714 = vmatpush1.msra.mxu0 0.0
        %715 = vmatprep.subr.mxu0 0.0
        %716 = vmatpush1.msra.mxu0 0.0
        %717 = vmatprep.subr.mxu0 0.0
        %718 = vmatpush1.msra.mxu0 0.0
        %719 = vmatprep.subr.mxu0 0.0
        %720 = vmatpush1.msra.mxu0 0.0
        %721 = vmatprep.subr.mxu0 0.0
        %722 = vmatpush1.msra.mxu0 0.0
        %723 = vmatprep.subr.mxu0 0.0
        %724 = vmatpush1.msra.mxu0 0.0
        %725 = vmatprep.subr.mxu0 0.0
        %726 = vmatpush1.msra.mxu0 0.0
        %727 = vmatprep.subr.mxu0 0.0
        %728 = vmatpush1.msra.mxu0 0.0
        %729 = vmatprep.subr.mxu0 0.0
        %730 = vmatpush1.msra.mxu0 0.0
        %731 = vmatprep.subr.mxu0 0.0
        %732 = vmatpush1.msra.mxu0 0.0
        %733 = vmatprep.subr.mxu0 0.0
        %734 = vmatpush1.msra.mxu0 0.0
        %735 = vmatprep.subr.mxu0 0.0
        %736 = vmatpush1.msra.mxu0 0.0
        %737 = vmatprep.mubr.f32.mxu0 %v656
        %738 = vmatmul.mubr.f32.gmra.mrb[0].mxu0 %v642
        %v739 = vpop.f32.mrb[0].mxu0
        %v740 = vadd.f32 0.0, %v739
        %v741 = vpop.f32.mrb[0].mxu0
        %v742 = vadd.f32 0.0, %v741
        %743 = vmatprep.mubr.f32.mxu0 %v659
        %744 = vmatmul.mubr.f32.gmra.mrb[0].mxu0 %v644
        %v745 = vpop.f32.mrb[0].mxu0
        %v746 = vadd.f32 0.0, %v745
        %v747 = vpop.f32.mrb[0].mxu0
        %v748 = vadd.f32 0.0, %v747
        %749 = vmatprep.mubr.f32.mxu0 %v662
        %750 = vmatmul.mubr.f32.gmra.mrb[0].mxu0 %v646
        %v751 = vpop.f32.mrb[0].mxu0
        %v752 = vadd.f32 0.0, %v751
        %v753 = vpop.f32.mrb[0].mxu0
        %v754 = vadd.f32 0.0, %v753
        %755 = vmatprep.mubr.f32.mxu0 %v665
        %756 = vmatmul.mubr.f32.gmra.mrb[0].mxu0 %v648
        %v757 = vpop.f32.mrb[0].mxu0
        %v758 = vadd.f32 0.0, %v757
        %v759 = vpop.f32.mrb[0].mxu0
        %v760 = vadd.f32 0.0, %v759
        %761 = vmatprep.mubr.f32.mxu0 %v668
        %762 = vmatmul.mubr.f32.gmra.mrb[0].mxu0 %v650
        %v763 = vpop.f32.mrb[0].mxu0
        %v764 = vadd.f32 0.0, %v763
        %v765 = vpop.f32.mrb[0].mxu0
        %v766 = vadd.f32 0.0, %v765
        %767 = vmatprep.mubr.f32.mxu0 %v671
        %768 = vmatmul.mubr.f32.gmra.mrb[0].mxu0 %v652
        %v769 = vpop.f32.mrb[0].mxu0
        %v770 = vadd.f32 0.0, %v769
        %v771 = vpop.f32.mrb[0].mxu0
        %v772 = vadd.f32 0.0, %v771
        %773 = vdwg.mxu0
        %v774 = vmul.f32 %v740, %v403
        %v775 = vmul.f32 %v742, %v404
        %v776 = vmul.f32 %v746, %v405
        %v777 = vmul.f32 %v748, %v406
        %v778 = vadd.f32 %v774, %v776
        %v779 = vrot.slane %v778, 4
        %v780 = vadd.f32 %v778, %v779
        %v781 = vrot.slane %v780, 2
        %v782 = vadd.f32 %v780, %v781
        %v783 = vrot.slane %v782, 1
        %v784 = vadd.f32 %v782, %v783
        %v785 = vadd.f32 %v775, %v777
        %v786 = vrot.slane %v785, 4
        %v787 = vadd.f32 %v785, %v786
        %v788 = vrot.slane %v787, 2
        %v789 = vadd.f32 %v787, %v788
        %v790 = vrot.slane %v789, 1
        %v791 = vadd.f32 %v789, %v790
        %v792 = vmul.f32 %v752, %v403
        %v793 = vmul.f32 %v754, %v404
        %v794 = vmul.f32 %v758, %v405
        %v795 = vmul.f32 %v760, %v406
        %v796 = vadd.f32 %v792, %v794
        %v797 = vrot.slane %v796, 4
        %v798 = vadd.f32 %v796, %v797
        %v799 = vrot.slane %v798, 2
        %v800 = vadd.f32 %v798, %v799
        %v801 = vrot.slane %v800, 1
        %v802 = vadd.f32 %v800, %v801
        %v803 = vadd.f32 %v793, %v795
        %v804 = vrot.slane %v803, 4
        %v805 = vadd.f32 %v803, %v804
        %v806 = vrot.slane %v805, 2
        %v807 = vadd.f32 %v805, %v806
        %v808 = vrot.slane %v807, 1
        %v809 = vadd.f32 %v807, %v808
        %v810 = vmul.f32 %v764, %v403
        %v811 = vmul.f32 %v766, %v404
        %v812 = vmul.f32 %v770, %v405
        %v813 = vmul.f32 %v772, %v406
        %v814 = vadd.f32 %v810, %v812
        %v815 = vrot.slane %v814, 4
        %v816 = vadd.f32 %v814, %v815
        %v817 = vrot.slane %v816, 2
        %v818 = vadd.f32 %v816, %v817
        %v819 = vrot.slane %v818, 1
        %v820 = vadd.f32 %v818, %v819
        %v821 = vadd.f32 %v811, %v813
        %v822 = vrot.slane %v821, 4
        %v823 = vadd.f32 %v821, %v822
        %v824 = vrot.slane %v823, 2
        %v825 = vadd.f32 %v823, %v824
        %v826 = vrot.slane %v825, 1
        %v827 = vadd.f32 %v825, %v826
        %vm828 = vcmask 1040384
        %v829 = vsel %vm828, %v784, %v802
        %v830 = vsel %vm828, %v791, %v809
        %vm831 = vcmask 1041408
        %v832 = vsel %vm831, %v829, %v820
        %v833 = vsel %vm831, %v830, %v827
        %v836 = vcombine.low %v832, %v833
        %838 = vst [vmem:[%s221] sm:$0x77] %v836
        %s839 = smul.u32 2, %s21
        %p840 = scmp.lt.s32.totalorder %s20, 1
        %s841 = scalar_select %p840, %s20, 1
        %p842 = scmp.lt.s32.totalorder %s839, 1
        %s843 = scalar_select %p842, %s839, 1
        %s844 = smul.addr %s841, 2
        %s845 = sadd.s32 %s843, %s844
        %s846 = smul.addr %s845, 4
        %s847 = scalar_lea.vmem %s2, %s846
        // Predicated region
        $region33: #{tpu_custom_call.1} parent=27 // pred_check
          %p848 = pneg %p102
        $region34: #{tpu_custom_call.1} parent=27 // pred_check_branch
          %850 = sbr.rel (%p848) target = $region36
        $region35: #{tpu_custom_call.1} parent=27 // pred_region
          %s851 = smul.u32 2, %s21
        $region36: #{tpu_custom_call.1} parent=27 // pred_fallthru
          _
      $region28: #{tpu_custom_call.1} parent=5 // pred_fallthru
        _
      %p852 = scmp.le.s32.totalorder 2, %s11
      // Predicated region
      $region37: #{tpu_custom_call.1} parent=5 // pred_check
        %p853 = pneg %p852
      $region38: #{tpu_custom_call.1} parent=5 // pred_check_branch
        %855 = sbr.rel (%p853) target = $region40
      $region39: #{tpu_custom_call.1} parent=5 // pred_region
        %s856 = ssub.s32 %s11, 2
        // Predicated region
        $region41: #{tpu_custom_call.1} parent=39 // pred_check
          %p857 = pneg %p108
        $region42: #{tpu_custom_call.1} parent=39 // pred_check_branch
          %859 = sbr.rel (%p857) target = $region44
        $region43: #{tpu_custom_call.1} parent=39 // pred_region
          %s860 = smul.u32 2, %s23
          %p861 = scmp.lt.s32.totalorder %s22, 1
          %s862 = scalar_select %p861, %s22, 1
          %p863 = scmp.lt.s32.totalorder %s860, 1
          %s864 = scalar_select %p863, %s860, 1
          %s865 = smul.addr %s862, 2
          %s866 = sadd.s32 %s864, %s865
          %s867 = smul.addr %s866, 4
          %s868 = scalar_lea.vmem %s2, %s867
        $region44: #{tpu_custom_call.1} parent=39 // pred_fallthru
          _
      $region40: #{tpu_custom_call.1} parent=5 // pred_fallthru
        _
    $region6: #{tpu_custom_call.1} parent=1 // loop_footer
      %s15 = sadd.s32 1, %s11
    $region7: #{tpu_custom_call.1} parent=1 // loop_footer_branch
      %10 = sbr.rel target = $region3
    $region8: #{tpu_custom_call.1} parent=1 // loop_exit
      _
    %869 = vsyncpa [#allocation3], 1
    %s870 = scalar_lea.sflag [#allocation3], 1
    %871 = vsyncpa %s870, 1

</llo_original>
